<compile_context>
chip_gen: v6e
topology: v6e:2x2x1
jax: 0.10.0
libtpu: 0.0.40
codegen_flags: <defaults>
</compile_context>

<pallas_src>
import jax
import jax.numpy as jnp
from jax.experimental import pallas as pl
from jax.experimental.pallas import tpu as pltpu


# ----------------------------- configuration ------------------------------ #
_LANES = 512                       # lane-dense (multiple of 128) -> unmasked vst
_TARGET_BLOCK_BYTES = 4 << 20      # ~4 MiB per block => ~16 MiB of I/O double buffers
_VMEM_LIMIT_BYTES = 40 << 20       # fits v5e/v6e (128 MiB phys) and v7x (64 MiB phys)
_SMALL_N = 1 << 16                 # below this, launch overhead dominates -> plain jnp
_TARGET_MIN_TILES = 4              # always >=4 row tiles: pipelining + v7x dual-TC
_FAST_RECIPROCAL = False           # True: `* (1/255)` (<=1 ulp off) instead of exact `/255`


def _quantize_math(x_f32):
    """round(x*255)/255 in f32.  Shared by the kernel and the jnp fallback."""
    y = jnp.round(x_f32 * 255.0)
    if _FAST_RECIPROCAL:
        return y * jnp.float32(1.0 / 255.0)
    return y / 255.0


# ----------------------------- Pallas kernel ------------------------------ #
def _quantize_kernel(x_ref, o_ref):
    # Cast up in-vreg (bf16 inputs round in f32), quantize, cast back to the
    # output dtype.  Pure VPU work; HBM streaming is the bottleneck.
    x = x_ref[...].astype(jnp.float32)
    o_ref[...] = _quantize_math(x).astype(o_ref.dtype)


def jpeg_like_quantize(x):
    """Non-differentiable preprocessing (pixel quantization) — the `forward`
    function wrapped by BPDAWrapper in the JPEG-defense setting.

    Expects float inputs in [0, 1] (as in the PyTorch pipeline)."""
    if not jnp.issubdtype(x.dtype, jnp.floating):
        raise TypeError(
            "jpeg_like_quantize expects a floating dtype in [0, 1]; "
            f"got {x.dtype}. Normalize uint8 images first.")

    orig_shape = x.shape
    dtype = x.dtype
    n = x.size

    # Small or ragged inputs: single fused XLA pass.  Same HBM traffic as the
    # kernel (1 read + 1 write) but no custom-call launch / pad / slice cost.
    if n < _SMALL_N or n % _LANES != 0:
        return _quantize_math(x.astype(jnp.float32)).astype(dtype)

    itemsize = jnp.dtype(dtype).itemsize
    rows = n // _LANES                      # >= 128 given _SMALL_N / _LANES

    # ~4 MiB blocks, but always at least _TARGET_MIN_TILES row tiles so the
    # pipeline overlaps and both v7x TensorCores are used.  tile_rows is a
    # multiple of 8 (sublane aligned); a partial last block (rows % tile_rows)
    # is masked by the Pallas pipeline.
    max_tile_rows = max(8, (_TARGET_BLOCK_BYTES // (_LANES * itemsize)) // 8 * 8)
    tile_rows = min(max_tile_rows, ((pl.cdiv(rows, _TARGET_MIN_TILES) + 7) // 8) * 8)
    grid = (pl.cdiv(rows, tile_rows),)

    x2d = x.reshape(rows, _LANES)           # contiguous -> free bitcast reshape

    out2d = pl.pallas_call(
        _quantize_kernel,
        out_shape=jax.ShapeDtypeStruct((rows, _LANES), dtype),
        grid=grid,
        in_specs=[pl.BlockSpec((tile_rows, _LANES), lambda i: (i, 0))],
        out_specs=pl.BlockSpec((tile_rows, _LANES), lambda i: (i, 0)),
        compiler_params=pltpu.CompilerParams(
            dimension_semantics=("parallel",),
            vmem_limit_bytes=_VMEM_LIMIT_BYTES),
        cost_estimate=pl.CostEstimate(
            flops=3 * n,
            transcendentals=0,
            bytes_accessed=2 * n * itemsize),
        # NOTE: callers that donate `x` could add input_output_aliases={0: 0}
        # to halve the HBM footprint for large attack batches (traffic is
        # unchanged, so not done by default).
    )(x2d)

    return out2d.reshape(orig_shape)


# ------------------------------ BPDAWrapper -------------------------------- #
class FunctionWrapper:
    """Wraps a callable (JAX analogue of nn.Module wrapping autograd.Function)."""

    def __init__(self, func):
        self.func = func

    def __call__(self, *inputs):
        return self.func(*inputs)

    # mirror nn.Module.forward
    def forward(self, *inputs):
        return self.func(*inputs)


class BPDAWrapper(FunctionWrapper):
    """Backward Pass Differentiable Approximation.

    forward pass  : `forward(*inputs)`  (the Pallas kernel)
    backward pass : identity (default), or grad of `forwardsub`, or a custom
                    `backward(inputs, grad_outputs)` function.

    Note: with the default identity backward and multiple inputs, the single
    output cotangent is broadcast to every input (faithful to the PyTorch
    reference); inputs must therefore share the output's shape/dtype.
    """

    def __init__(self, forward, forwardsub=None, backward=None):
        func = self._create_func(forward, backward, forwardsub)
        super().__init__(func)

    @classmethod
    def _create_func(cls, forward_fn, backward_fn, forwardsub_fn):
        if backward_fn is not None:
            return cls._create_func_backward(forward_fn, backward_fn)
        if forwardsub_fn is not None:
            return cls._create_func_forwardsub(forward_fn, forwardsub_fn)
        return cls._create_func_forward_only(forward_fn)

    @staticmethod
    def _create_func_forward_only(forward_fn):
        """forward = forward_fn, backward = identity (straight-through)."""

        @jax.custom_vjp
        def fn(*inputs):
            return forward_fn(*inputs)

        def fwd(*inputs):
            # mirrors ctx.save_for_backward(*inputs)
            return forward_fn(*inputs), inputs

        def bwd(inputs, g):
            # single grad output broadcast to every saved input (identity)
            return tuple(g for _ in inputs)

        fn.defvjp(fwd, bwd)
        return fn

    @staticmethod
    def _create_func_forwardsub(forward_fn, forwardsub_fn):
        """backward pass = gradient of the substitute forward function."""

        @jax.custom_vjp
        def fn(*inputs):
            return forward_fn(*inputs)

        def fwd(*inputs):
            return forward_fn(*inputs), inputs

        def bwd(inputs, g):
            _, vjp = jax.vjp(forwardsub_fn, *inputs)
            return vjp(g)

        fn.defvjp(fwd, bwd)
        return fn

    @staticmethod
    def _create_func_backward(forward_fn, backward_fn):
        """backward pass = user-provided backward(inputs, grad_outputs)."""

        @jax.custom_vjp
        def fn(*inputs):
            return forward_fn(*inputs)

        def fwd(*inputs):
            return forward_fn(*inputs), inputs

        def bwd(inputs, g):
            return tuple(backward_fn(inputs, (g,)))

        fn.defvjp(fwd, bwd)
        return fn


# --------------------------------- main ------------------------------------ #
if __name__ == "__main__":
    key = jax.random.PRNGKey(0)

    def ref_quant(z):
        return _quantize_math(z.astype(jnp.float32)).astype(z.dtype)

    module = BPDAWrapper(forward=jpeg_like_quantize)

    # 1) Primary small NCHW input in [0, 1] (matches the PyTorch module usage).
    #    Small -> fused jnp path (review: bypass the custom call for tiny inputs).
    x = jax.random.uniform(key, (2, 4, 16, 16), dtype=jnp.float32)
    y = jax.block_until_ready(module(x))
    assert y.shape == x.shape and y.dtype == x.dtype
    assert jnp.allclose(y, ref_quant(x), atol=1e-6, rtol=0.0)

    # backward pass: identity / straight-through (BPDA semantics)
    g = jax.block_until_ready(jax.grad(lambda z: jnp.sum(module(z)))(x))
    assert jnp.allclose(g, jnp.ones_like(x))

    # 2) Odd-shaped small input (size not a multiple of 512) -> fused jnp path,
    #    no pad / slice traffic.
    x2 = jax.random.uniform(jax.random.PRNGKey(1), (3, 3, 17, 19), dtype=jnp.float32)
    y2 = jax.block_until_ready(module(x2))
    assert y2.shape == x2.shape
    assert jnp.allclose(y2, ref_quant(x2), atol=1e-6, rtol=0.0)

    # 3) Large aligned batch -> Pallas kernel path (rows=768, 4 row tiles,
    #    pipelined, dual-TC on v7x).
    x3 = jax.random.uniform(jax.random.PRNGKey(2), (8, 3, 128, 128), dtype=jnp.float32)
    y3 = jax.block_until_ready(module(x3))
    assert y3.shape == x3.shape and y3.dtype == x3.dtype
    assert jnp.allclose(y3, ref_quant(x3), atol=1e-6, rtol=0.0)

    # backward through the Pallas path is still the straight-through identity
    g3 = jax.block_until_ready(jax.grad(lambda z: jnp.sum(module(z)))(x3))
    assert jnp.allclose(g3, jnp.ones_like(x3))

    # 4) Large batch whose row count is NOT a multiple of the tile (rows=300,
    #    tile_rows=80) -> exercises the masked partial last block.
    x4 = jax.random.uniform(jax.random.PRNGKey(3), (4, 3, 100, 128), dtype=jnp.float32)
    y4 = jax.block_until_ready(module(x4))
    assert y4.shape == x4.shape
    assert jnp.allclose(y4, ref_quant(x4), atol=1e-6, rtol=0.0)

    # 5) forwardsub variant: backward uses the gradient of a smooth substitute.
    module_sub = BPDAWrapper(forward=jpeg_like_quantize, forwardsub=lambda z: 2.0 * z)
    g_sub = jax.block_until_ready(jax.grad(lambda z: jnp.sum(module_sub(z)))(x))
    assert jnp.allclose(g_sub, 2.0 * jnp.ones_like(x))

    print("KERNEL_OK")
</pallas_src>

<mosaic_0001>
module attributes {stable_mosaic.version = 11 : i64} {
  func.func @_quantize_kernel(%arg0: i32, %arg1: memref<192x512xf32, #tpu.memory_space<vmem>>, %arg2: memref<192x512xf32, #tpu.memory_space<vmem>>) attributes {dimension_semantics = [#tpu.dimension_semantics<parallel>], iteration_bounds = array<i64: 4>, scalar_prefetch = 0 : i64, scratch_operands = 0 : i64, tpu.core_type = #tpu.core_type<tc>, window_params = [{transform_indices = @transform_0, window_bounds = array<i64: 192, 512>}, {transform_indices = @transform_1, window_bounds = array<i64: 192, 512>}]} {
    %c0 = arith.constant 0 : index
    %c0_0 = arith.constant 0 : index
    %0 = vector.load %arg1[%c0, %c0_0] : memref<192x512xf32, #tpu.memory_space<vmem>>, vector<192x512xf32>
    %cst = arith.constant 2.550000e+02 : f32
    %1 = vector.broadcast %cst : f32 to vector<192x512xf32>
    %2 = arith.mulf %0, %1 : vector<192x512xf32>
    %3 = math.roundeven %2 : vector<192x512xf32>
    %cst_1 = arith.constant 2.550000e+02 : f32
    %4 = vector.broadcast %cst_1 : f32 to vector<192x512xf32>
    %5 = arith.divf %3, %4 : vector<192x512xf32>
    %c0_2 = arith.constant 0 : index
    %c0_3 = arith.constant 0 : index
    %6 = vector.load %arg2[%c0_2, %c0_3] : memref<192x512xf32, #tpu.memory_space<vmem>>, vector<192x512xf32>
    tpu.vector_store %arg2[%c0_2, %c0_3], %5 {strides = array<i32>} : memref<192x512xf32, #tpu.memory_space<vmem>>, vector<192x512xf32>,
    return
  }
  func.func @transform_0(%arg0: i32) -> (i32, i32) {
    %c0_i32 = arith.constant 0 : i32
    %c0_i32_0 = arith.constant 0 : i32
    return %arg0, %c0_i32 : i32, i32
  }
  func.func @transform_1(%arg0: i32) -> (i32, i32) {
    %c0_i32 = arith.constant 0 : i32
    %c0_i32_0 = arith.constant 0 : i32
    return %arg0, %c0_i32 : i32, i32
  }
}

</mosaic_0001>

<llo_original>
// kernel: tpu_custom_call.1
$region0: #{tpu_custom_call.1}
  #allocation0 [shape = 'u32[]', space=smem, size = 0x4, offset = 0x4, fixed_abs, tag = 'smem constant byte address 0x4 - core index']
  #allocation1 [shape = 'u32[144,128]{1,0:T(1,128)}', space=vmem, size = 0x12000, scoped, tag = 'internal scratch']
  %s0 = inlined_call_operand.hbm [shape: f32[768,512], index: 0, kind: input, shape index: {}]
  %s1 = inlined_call_operand.hbm [shape: f32[768,512], index: 1, kind: output, shape index: {}]
  %s2 = sld [smem:[#allocation0]]
  $region41: #{tpu_custom_call.1} parent=0
    _
  %s4 = ssub.s32 1, %s2
  %s5 = scalar_select 0, %s4, %s2
  $region1: #{tpu_custom_call.1} parent=0
    #allocation2 [shape = 'u8[786432]{0}', space=vmem, size = 0xc0000, scoped, tag = 'input window, operand 0']
    #allocation3 [shape = 's32[2]{0}', space=sflag, size = 0x8, scoped, tag = 'scoped memory for tpu_custom_call.1']
    #allocation4 [shape = 's32[2]{0}', space=sflag, size = 0x8, scoped, tag = 'scoped memory for tpu_custom_call.1']
    #allocation5 [shape = 'u8[786432]{0}', space=vmem, size = 0xc0000, scoped, tag = 'output window, operand 0']
    %6 = vsyncpa [#allocation3], 0
    %s7 = scalar_lea.sflag [#allocation3], 1
    %8 = vsyncpa %s7, 0
    %9 = vsyncpa [#allocation4], 0
    %s10 = scalar_lea.sflag [#allocation4], 1
    %11 = vsyncpa %s10, 0
    loop: start=0, step=1, limit=6
    $region2: #{tpu_custom_call.1} parent=1 // loop_pre_header
      _
    $region3: #{tpu_custom_call.1} parent=1 // loop_header
      %s13 = sphi 0, %s17
      %p14 = scmp.ge.s32.totalorder %s13, 6
      %s23 = sphi 0, %s25
      %s26 = sphi 0, %s23
      %s27 = sphi 0, %s26
      %s43 = sphi 0, %s27
      %s49 = sphi 0, %s51
      %s52 = sphi 0, %s49
      %s53 = sphi 0, %s52
      %s69 = sphi 0, %s53
    $region4: #{tpu_custom_call.1} parent=1 // loop_header_branch
      %16 = sbr.rel (%p14) target = $region8
    $region5: #{tpu_custom_call.1} parent=1 // loop_body
      %s18 = ssub.s32 %s13, 1
      %s19 = ssub.s32 %s13, 2
      %s20 = sadd.s32 %s13, 1
      %s21 = ssub.s32 %s13, %s20
      %p22 = scmp.eq.s32.totalorder %s21, 0
      %s24 = sadd.s32 %s23, 1
      %s25 = scalar_select %p22, %s23, %s24
      %p28 = pneg %p22
      %p29 = scmp.eq.s32.totalorder %s13, 3
      %p30 = por %p28, %p29
      %p31 = scmp.ne.s32.totalorder %s23, %s26
      %p32 = scmp.eq.s32.totalorder %s13, 0
      %p33 = por %p31, %p32
      %p34 = scmp.ne.s32.totalorder %s23, %s26
      %p35 = scmp.eq.s32.totalorder %s18, 3
      %p36 = por %p34, %p35
      %p37 = scmp.ne.s32.totalorder %s26, %s27
      %p38 = scmp.eq.s32.totalorder %s18, 0
      %p39 = por %p37, %p38
      %p40 = scmp.ne.s32.totalorder %s26, %s27
      %p41 = scmp.eq.s32.totalorder %s19, 3
      %p42 = por %p40, %p41
      %p44 = scmp.ne.s32.totalorder %s27, %s43
      %p45 = scmp.eq.s32.totalorder %s19, 0
      %p46 = por %p44, %p45
      %s47 = ssub.s32 %s13, %s20
      %p48 = scmp.eq.s32.totalorder %s47, 0
      %s50 = sadd.s32 %s49, 1
      %s51 = scalar_select %p48, %s49, %s50
      %p54 = pneg %p48
      %p55 = scmp.eq.s32.totalorder %s13, 3
      %p56 = por %p54, %p55
      %p57 = scmp.ne.s32.totalorder %s49, %s52
      %p58 = scmp.eq.s32.totalorder %s13, 0
      %p59 = por %p57, %p58
      %p60 = scmp.ne.s32.totalorder %s49, %s52
      %p61 = scmp.eq.s32.totalorder %s18, 3
      %p62 = por %p60, %p61
      %p63 = scmp.ne.s32.totalorder %s52, %s53
      %p64 = scmp.eq.s32.totalorder %s18, 0
      %p65 = por %p63, %p64
      %p66 = scmp.ne.s32.totalorder %s52, %s53
      %p67 = scmp.eq.s32.totalorder %s19, 3
      %p68 = por %p66, %p67
      %p70 = scmp.ne.s32.totalorder %s53, %s69
      %p71 = scmp.eq.s32.totalorder %s19, 0
      %p72 = por %p70, %p71
      %p73 = scmp.le.s32.totalorder 1, %s13
      %p74 = scmp.lt.s32.totalorder %s13, 5
      %p75 = pnand %p73, %p74
      %p76 = pneg %p75
      // Predicated region
      $region9: #{tpu_custom_call.1} parent=5 // pred_check
        _
      $region10: #{tpu_custom_call.1} parent=5 // pred_check_branch
        %78 = sbr.rel (%p75) target = $region12
      $region11: #{tpu_custom_call.1} parent=5 // pred_region
        %s79 = ssub.s32 %s13, 1
      $region12: #{tpu_custom_call.1} parent=5 // pred_fallthru
        _
      %p80 = scmp.lt.s32.totalorder %s13, 4
      // Predicated region
      $region13: #{tpu_custom_call.1} parent=5 // pred_check
        %p81 = pneg %p80
      $region14: #{tpu_custom_call.1} parent=5 // pred_check_branch
        %83 = sbr.rel (%p81) target = $region16
      $region15: #{tpu_custom_call.1} parent=5 // pred_region
        // Predicated region
        $region17: #{tpu_custom_call.1} parent=15 // pred_check
          %p84 = pneg %p33
        $region18: #{tpu_custom_call.1} parent=15 // pred_check_branch
          %86 = sbr.rel (%p84) target = $region20
        $region19: #{tpu_custom_call.1} parent=15 // pred_region
          %s87 = sand.u32 %s23, 1
          %s88 = scalar_lea.sflag [#allocation3], %s87
          %s89 = sand.u32 %s23, 1
          %s90 = smul.addr %s89, 768
          %s91 = scalar_lea.vmem [#allocation2], %s90
          %s92 = smul.u32 24, %s13
          %s94 = ssub.s32 12288, 12288
          %95 = vsyncadd %s88, %s94
          %s96 = smul.addr %s92, 4
          %s97 = smul.addr %s96, 128
          %s98 = scalar_lea.hbm %s0, %s97
          %s99 = sshll.u32 %s91, 4
          %s100 = int_to_ptr.vmem [resolvable:$true] %s99
          %105 = dma.hbm_to_vmem [thread:$0]  %s98, 12288, %s100, %s88, 512, 512, 32
        $region20: #{tpu_custom_call.1} parent=15 // pred_fallthru
          _
      $region16: #{tpu_custom_call.1} parent=5 // pred_fallthru
        _
      %p106 = scmp.le.s32.totalorder 1, %s13
      %p107 = scmp.lt.s32.totalorder %s13, 5
      %p108 = pnand %p106, %p107
      %p109 = pneg %p108
      // Predicated region
      $region21: #{tpu_custom_call.1} parent=5 // pred_check
        _
      $region22: #{tpu_custom_call.1} parent=5 // pred_check_branch
        %111 = sbr.rel (%p108) target = $region24
      $region23: #{tpu_custom_call.1} parent=5 // pred_region
        %s112 = ssub.s32 %s13, 1
        %s113 = sand.u32 %s26, 1
        %s114 = scalar_lea.sflag [#allocation3], %s113
        %s115 = sand.u32 %s26, 1
        %s116 = smul.addr %s115, 768
        %s117 = scalar_lea.vmem [#allocation2], %s116
        // Predicated region
        $region25: #{tpu_custom_call.1} parent=23 // pred_check
          %p118 = pneg %p39
        $region26: #{tpu_custom_call.1} parent=23 // pred_check_branch
          %120 = sbr.rel (%p118) target = $region28
        $region27: #{tpu_custom_call.1} parent=23 // pred_region
          %121 = dma.done %s114, 12288
        $region28: #{tpu_custom_call.1} parent=23 // pred_fallthru
          _
        %s122 = sand.u32 %s26, 1
        %s123 = scalar_lea.sflag [#allocation3], %s122
        %s124 = sand.u32 %s26, 1
        %s125 = smul.addr %s124, 768
        %s126 = scalar_lea.vmem [#allocation2], %s125
        %p127 = pneg %p39
        %p128 = pneg %p36
        %p129 = pneg %p65
        %p130 = pneg %p62
        %s131 = sand.u32 %s52, 1
        %s132 = scalar_lea.sflag [#allocation4], %s131
        %s133 = sand.u32 %s52, 1
        %s134 = smul.addr %s133, 768
        %s135 = scalar_lea.vmem [#allocation5], %s134
        %s136 = smul.u32 24, %s18
        %s137 = smul.u32 24, %s18
        %v138 = vld [vmem:[%s117] sm:$0xff]
        %v139 = vld [vmem:[%s117 + $0x8] sm:$0xff]
        %v140 = vld [vmem:[%s117 + $0x10] sm:$0xff]
        %v141 = vld [vmem:[%s117 + $0x18] sm:$0xff]
        %v142 = vld [vmem:[%s117 + $0x20] sm:$0xff]
        %v143 = vld [vmem:[%s117 + $0x28] sm:$0xff]
        %v144 = vld [vmem:[%s117 + $0x30] sm:$0xff]
        %v145 = vld [vmem:[%s117 + $0x38] sm:$0xff]
        %v146 = vld [vmem:[%s117 + $0x40] sm:$0xff]
        %v147 = vld [vmem:[%s117 + $0x48] sm:$0xff]
        %v148 = vld [vmem:[%s117 + $0x50] sm:$0xff]
        %v149 = vld [vmem:[%s117 + $0x58] sm:$0xff]
        %v150 = vld [vmem:[%s117 + $0x60] sm:$0xff]
        %v151 = vld [vmem:[%s117 + $0x68] sm:$0xff]
        %v152 = vld [vmem:[%s117 + $0x70] sm:$0xff]
        %v153 = vld [vmem:[%s117 + $0x78] sm:$0xff]
        %v154 = vld [vmem:[%s117 + $0x80] sm:$0xff]
        %v155 = vld [vmem:[%s117 + $0x88] sm:$0xff]
        %v156 = vld [vmem:[%s117 + $0x90] sm:$0xff]
        %v157 = vld [vmem:[%s117 + $0x98] sm:$0xff]
        %v158 = vld [vmem:[%s117 + $0xa0] sm:$0xff]
        %v159 = vld [vmem:[%s117 + $0xa8] sm:$0xff]
        %v160 = vld [vmem:[%s117 + $0xb0] sm:$0xff]
        %v161 = vld [vmem:[%s117 + $0xb8] sm:$0xff]
        %v162 = vld [vmem:[%s117 + $0xc0] sm:$0xff]
        %v163 = vld [vmem:[%s117 + $0xc8] sm:$0xff]
        %v164 = vld [vmem:[%s117 + $0xd0] sm:$0xff]
        %v165 = vld [vmem:[%s117 + $0xd8] sm:$0xff]
        %v166 = vld [vmem:[%s117 + $0xe0] sm:$0xff]
        %v167 = vld [vmem:[%s117 + $0xe8] sm:$0xff]
        %v168 = vld [vmem:[%s117 + $0xf0] sm:$0xff]
        %v169 = vld [vmem:[%s117 + $0xf8] sm:$0xff]
        %v170 = vld [vmem:[%s117 + $0x100] sm:$0xff]
        %v171 = vld [vmem:[%s117 + $0x108] sm:$0xff]
        %v172 = vld [vmem:[%s117 + $0x110] sm:$0xff]
        %v173 = vld [vmem:[%s117 + $0x118] sm:$0xff]
        %v174 = vld [vmem:[%s117 + $0x120] sm:$0xff]
        %v175 = vld [vmem:[%s117 + $0x128] sm:$0xff]
        %v176 = vld [vmem:[%s117 + $0x130] sm:$0xff]
        %v177 = vld [vmem:[%s117 + $0x138] sm:$0xff]
        %v178 = vld [vmem:[%s117 + $0x140] sm:$0xff]
        %v179 = vld [vmem:[%s117 + $0x148] sm:$0xff]
        %v180 = vld [vmem:[%s117 + $0x150] sm:$0xff]
        %v181 = vld [vmem:[%s117 + $0x158] sm:$0xff]
        %v182 = vld [vmem:[%s117 + $0x160] sm:$0xff]
        %v183 = vld [vmem:[%s117 + $0x168] sm:$0xff]
        %v184 = vld [vmem:[%s117 + $0x170] sm:$0xff]
        %v185 = vld [vmem:[%s117 + $0x178] sm:$0xff]
        %v186 = vld [vmem:[%s117 + $0x180] sm:$0xff]
        %v187 = vld [vmem:[%s117 + $0x188] sm:$0xff]
        %v188 = vld [vmem:[%s117 + $0x190] sm:$0xff]
        %v189 = vld [vmem:[%s117 + $0x198] sm:$0xff]
        %v190 = vld [vmem:[%s117 + $0x1a0] sm:$0xff]
        %v191 = vld [vmem:[%s117 + $0x1a8] sm:$0xff]
        %v192 = vld [vmem:[%s117 + $0x1b0] sm:$0xff]
        %v193 = vld [vmem:[%s117 + $0x1b8] sm:$0xff]
        %v194 = vld [vmem:[%s117 + $0x1c0] sm:$0xff]
        %v195 = vld [vmem:[%s117 + $0x1c8] sm:$0xff]
        %v196 = vld [vmem:[%s117 + $0x1d0] sm:$0xff]
        %v197 = vld [vmem:[%s117 + $0x1d8] sm:$0xff]
        %v198 = vld [vmem:[%s117 + $0x1e0] sm:$0xff]
        %v199 = vld [vmem:[%s117 + $0x1e8] sm:$0xff]
        %v200 = vld [vmem:[%s117 + $0x1f0] sm:$0xff]
        %v201 = vld [vmem:[%s117 + $0x1f8] sm:$0xff]
        %v202 = vld [vmem:[%s117 + $0x200] sm:$0xff]
        %v203 = vld [vmem:[%s117 + $0x208] sm:$0xff]
        %v204 = vld [vmem:[%s117 + $0x210] sm:$0xff]
        %v205 = vld [vmem:[%s117 + $0x218] sm:$0xff]
        %v206 = vld [vmem:[%s117 + $0x220] sm:$0xff]
        %v207 = vld [vmem:[%s117 + $0x228] sm:$0xff]
        %v208 = vld [vmem:[%s117 + $0x230] sm:$0xff]
        %v209 = vld [vmem:[%s117 + $0x238] sm:$0xff]
        %v210 = vld [vmem:[%s117 + $0x240] sm:$0xff]
        %v211 = vld [vmem:[%s117 + $0x248] sm:$0xff]
        %v212 = vld [vmem:[%s117 + $0x250] sm:$0xff]
        %v213 = vld [vmem:[%s117 + $0x258] sm:$0xff]
        %v214 = vld [vmem:[%s117 + $0x260] sm:$0xff]
        %v215 = vld [vmem:[%s117 + $0x268] sm:$0xff]
        %v216 = vld [vmem:[%s117 + $0x270] sm:$0xff]
        %v217 = vld [vmem:[%s117 + $0x278] sm:$0xff]
        %v218 = vld [vmem:[%s117 + $0x280] sm:$0xff]
        %v219 = vld [vmem:[%s117 + $0x288] sm:$0xff]
        %v220 = vld [vmem:[%s117 + $0x290] sm:$0xff]
        %v221 = vld [vmem:[%s117 + $0x298] sm:$0xff]
        %v222 = vld [vmem:[%s117 + $0x2a0] sm:$0xff]
        %v223 = vld [vmem:[%s117 + $0x2a8] sm:$0xff]
        %v224 = vld [vmem:[%s117 + $0x2b0] sm:$0xff]
        %v225 = vld [vmem:[%s117 + $0x2b8] sm:$0xff]
        %v226 = vld [vmem:[%s117 + $0x2c0] sm:$0xff]
        %v227 = vld [vmem:[%s117 + $0x2c8] sm:$0xff]
        %v228 = vld [vmem:[%s117 + $0x2d0] sm:$0xff]
        %v229 = vld [vmem:[%s117 + $0x2d8] sm:$0xff]
        %v230 = vld [vmem:[%s117 + $0x2e0] sm:$0xff]
        %v231 = vld [vmem:[%s117 + $0x2e8] sm:$0xff]
        %v232 = vld [vmem:[%s117 + $0x2f0] sm:$0xff]
        %v233 = vld [vmem:[%s117 + $0x2f8] sm:$0xff]
        %v234 = vmul.f32 %v138, 255.0
        %v235 = vmul.f32 %v139, 255.0
        %v236 = vmul.f32 %v140, 255.0
        %v237 = vmul.f32 %v141, 255.0
        %v238 = vmul.f32 %v142, 255.0
        %v239 = vmul.f32 %v143, 255.0
        %v240 = vmul.f32 %v144, 255.0
        %v241 = vmul.f32 %v145, 255.0
        %v242 = vmul.f32 %v146, 255.0
        %v243 = vmul.f32 %v147, 255.0
        %v244 = vmul.f32 %v148, 255.0
        %v245 = vmul.f32 %v149, 255.0
        %v246 = vmul.f32 %v150, 255.0
        %v247 = vmul.f32 %v151, 255.0
        %v248 = vmul.f32 %v152, 255.0
        %v249 = vmul.f32 %v153, 255.0
        %v250 = vmul.f32 %v154, 255.0
        %v251 = vmul.f32 %v155, 255.0
        %v252 = vmul.f32 %v156, 255.0
        %v253 = vmul.f32 %v157, 255.0
        %v254 = vmul.f32 %v158, 255.0
        %v255 = vmul.f32 %v159, 255.0
        %v256 = vmul.f32 %v160, 255.0
        %v257 = vmul.f32 %v161, 255.0
        %v258 = vmul.f32 %v162, 255.0
        %v259 = vmul.f32 %v163, 255.0
        %v260 = vmul.f32 %v164, 255.0
        %v261 = vmul.f32 %v165, 255.0
        %v262 = vmul.f32 %v166, 255.0
        %v263 = vmul.f32 %v167, 255.0
        %v264 = vmul.f32 %v168, 255.0
        %v265 = vmul.f32 %v169, 255.0
        %v266 = vmul.f32 %v170, 255.0
        %v267 = vmul.f32 %v171, 255.0
        %v268 = vmul.f32 %v172, 255.0
        %v269 = vmul.f32 %v173, 255.0
        %v270 = vmul.f32 %v174, 255.0
        %v271 = vmul.f32 %v175, 255.0
        %v272 = vmul.f32 %v176, 255.0
        %v273 = vmul.f32 %v177, 255.0
        %v274 = vmul.f32 %v178, 255.0
        %v275 = vmul.f32 %v179, 255.0
        %v276 = vmul.f32 %v180, 255.0
        %v277 = vmul.f32 %v181, 255.0
        %v278 = vmul.f32 %v182, 255.0
        %v279 = vmul.f32 %v183, 255.0
        %v280 = vmul.f32 %v184, 255.0
        %v281 = vmul.f32 %v185, 255.0
        %v282 = vmul.f32 %v186, 255.0
        %v283 = vmul.f32 %v187, 255.0
        %v284 = vmul.f32 %v188, 255.0
        %v285 = vmul.f32 %v189, 255.0
        %v286 = vmul.f32 %v190, 255.0
        %v287 = vmul.f32 %v191, 255.0
        %v288 = vmul.f32 %v192, 255.0
        %v289 = vmul.f32 %v193, 255.0
        %v290 = vmul.f32 %v194, 255.0
        %v291 = vmul.f32 %v195, 255.0
        %v292 = vmul.f32 %v196, 255.0
        %v293 = vmul.f32 %v197, 255.0
        %v294 = vmul.f32 %v198, 255.0
        %v295 = vmul.f32 %v199, 255.0
        %v296 = vmul.f32 %v200, 255.0
        %v297 = vmul.f32 %v201, 255.0
        %v298 = vmul.f32 %v202, 255.0
        %v299 = vmul.f32 %v203, 255.0
        %v300 = vmul.f32 %v204, 255.0
        %v301 = vmul.f32 %v205, 255.0
        %v302 = vmul.f32 %v206, 255.0
        %v303 = vmul.f32 %v207, 255.0
        %v304 = vmul.f32 %v208, 255.0
        %v305 = vmul.f32 %v209, 255.0
        %v306 = vmul.f32 %v210, 255.0
        %v307 = vmul.f32 %v211, 255.0
        %v308 = vmul.f32 %v212, 255.0
        %v309 = vmul.f32 %v213, 255.0
        %v310 = vmul.f32 %v214, 255.0
        %v311 = vmul.f32 %v215, 255.0
        %v312 = vmul.f32 %v216, 255.0
        %v313 = vmul.f32 %v217, 255.0
        %v314 = vmul.f32 %v218, 255.0
        %v315 = vmul.f32 %v219, 255.0
        %v316 = vmul.f32 %v220, 255.0
        %v317 = vmul.f32 %v221, 255.0
        %v318 = vmul.f32 %v222, 255.0
        %v319 = vmul.f32 %v223, 255.0
        %v320 = vmul.f32 %v224, 255.0
        %v321 = vmul.f32 %v225, 255.0
        %v322 = vmul.f32 %v226, 255.0
        %v323 = vmul.f32 %v227, 255.0
        %v324 = vmul.f32 %v228, 255.0
        %v325 = vmul.f32 %v229, 255.0
        %v326 = vmul.f32 %v230, 255.0
        %v327 = vmul.f32 %v231, 255.0
        %v328 = vmul.f32 %v232, 255.0
        %v329 = vmul.f32 %v233, 255.0
        %v330 = vround.ne.pseudo %v234
        %v331 = vround.ne.pseudo %v235
        %v332 = vround.ne.pseudo %v236
        %v333 = vround.ne.pseudo %v237
        %v334 = vround.ne.pseudo %v238
        %v335 = vround.ne.pseudo %v239
        %v336 = vround.ne.pseudo %v240
        %v337 = vround.ne.pseudo %v241
        %v338 = vround.ne.pseudo %v242
        %v339 = vround.ne.pseudo %v243
        %v340 = vround.ne.pseudo %v244
        %v341 = vround.ne.pseudo %v245
        %v342 = vround.ne.pseudo %v246
        %v343 = vround.ne.pseudo %v247
        %v344 = vround.ne.pseudo %v248
        %v345 = vround.ne.pseudo %v249
        %v346 = vround.ne.pseudo %v250
        %v347 = vround.ne.pseudo %v251
        %v348 = vround.ne.pseudo %v252
        %v349 = vround.ne.pseudo %v253
        %v350 = vround.ne.pseudo %v254
        %v351 = vround.ne.pseudo %v255
        %v352 = vround.ne.pseudo %v256
        %v353 = vround.ne.pseudo %v257
        %v354 = vround.ne.pseudo %v258
        %v355 = vround.ne.pseudo %v259
        %v356 = vround.ne.pseudo %v260
        %v357 = vround.ne.pseudo %v261
        %v358 = vround.ne.pseudo %v262
        %v359 = vround.ne.pseudo %v263
        %v360 = vround.ne.pseudo %v264
        %v361 = vround.ne.pseudo %v265
        %v362 = vround.ne.pseudo %v266
        %v363 = vround.ne.pseudo %v267
        %v364 = vround.ne.pseudo %v268
        %v365 = vround.ne.pseudo %v269
        %v366 = vround.ne.pseudo %v270
        %v367 = vround.ne.pseudo %v271
        %v368 = vround.ne.pseudo %v272
        %v369 = vround.ne.pseudo %v273
        %v370 = vround.ne.pseudo %v274
        %v371 = vround.ne.pseudo %v275
        %v372 = vround.ne.pseudo %v276
        %v373 = vround.ne.pseudo %v277
        %v374 = vround.ne.pseudo %v278
        %v375 = vround.ne.pseudo %v279
        %v376 = vround.ne.pseudo %v280
        %v377 = vround.ne.pseudo %v281
        %v378 = vround.ne.pseudo %v282
        %v379 = vround.ne.pseudo %v283
        %v380 = vround.ne.pseudo %v284
        %v381 = vround.ne.pseudo %v285
        %v382 = vround.ne.pseudo %v286
        %v383 = vround.ne.pseudo %v287
        %v384 = vround.ne.pseudo %v288
        %v385 = vround.ne.pseudo %v289
        %v386 = vround.ne.pseudo %v290
        %v387 = vround.ne.pseudo %v291
        %v388 = vround.ne.pseudo %v292
        %v389 = vround.ne.pseudo %v293
        %v390 = vround.ne.pseudo %v294
        %v391 = vround.ne.pseudo %v295
        %v392 = vround.ne.pseudo %v296
        %v393 = vround.ne.pseudo %v297
        %v394 = vround.ne.pseudo %v298
        %v395 = vround.ne.pseudo %v299
        %v396 = vround.ne.pseudo %v300
        %v397 = vround.ne.pseudo %v301
        %v398 = vround.ne.pseudo %v302
        %v399 = vround.ne.pseudo %v303
        %v400 = vround.ne.pseudo %v304
        %v401 = vround.ne.pseudo %v305
        %v402 = vround.ne.pseudo %v306
        %v403 = vround.ne.pseudo %v307
        %v404 = vround.ne.pseudo %v308
        %v405 = vround.ne.pseudo %v309
        %v406 = vround.ne.pseudo %v310
        %v407 = vround.ne.pseudo %v311
        %v408 = vround.ne.pseudo %v312
        %v409 = vround.ne.pseudo %v313
        %v410 = vround.ne.pseudo %v314
        %v411 = vround.ne.pseudo %v315
        %v412 = vround.ne.pseudo %v316
        %v413 = vround.ne.pseudo %v317
        %v414 = vround.ne.pseudo %v318
        %v415 = vround.ne.pseudo %v319
        %v416 = vround.ne.pseudo %v320
        %v417 = vround.ne.pseudo %v321
        %v418 = vround.ne.pseudo %v322
        %v419 = vround.ne.pseudo %v323
        %v420 = vround.ne.pseudo %v324
        %v421 = vround.ne.pseudo %v325
        %v422 = vround.ne.pseudo %v326
        %v423 = vround.ne.pseudo %v327
        %v424 = vround.ne.pseudo %v328
        %v425 = vround.ne.pseudo %v329
        %v426 = vrcp.pop 255.0
        %v427 = vmul.f32 %v330, %v426
        %v428 = vmul.f32 %v331, %v426
        %v429 = vmul.f32 %v332, %v426
        %v430 = vmul.f32 %v333, %v426
        %v431 = vmul.f32 %v334, %v426
        %v432 = vmul.f32 %v335, %v426
        %v433 = vmul.f32 %v336, %v426
        %v434 = vmul.f32 %v337, %v426
        %v435 = vmul.f32 %v338, %v426
        %v436 = vmul.f32 %v339, %v426
        %v437 = vmul.f32 %v340, %v426
        %v438 = vmul.f32 %v341, %v426
        %v439 = vmul.f32 %v342, %v426
        %v440 = vmul.f32 %v343, %v426
        %v441 = vmul.f32 %v344, %v426
        %v442 = vmul.f32 %v345, %v426
        %v443 = vmul.f32 %v346, %v426
        %v444 = vmul.f32 %v347, %v426
        %v445 = vmul.f32 %v348, %v426
        %v446 = vmul.f32 %v349, %v426
        %v447 = vmul.f32 %v350, %v426
        %v448 = vmul.f32 %v351, %v426
        %v449 = vmul.f32 %v352, %v426
        %v450 = vmul.f32 %v353, %v426
        %v451 = vmul.f32 %v354, %v426
        %v452 = vmul.f32 %v355, %v426
        %v453 = vmul.f32 %v356, %v426
        %v454 = vmul.f32 %v357, %v426
        %v455 = vmul.f32 %v358, %v426
        %v456 = vmul.f32 %v359, %v426
        %v457 = vmul.f32 %v360, %v426
        %v458 = vmul.f32 %v361, %v426
        %v459 = vmul.f32 %v362, %v426
        %v460 = vmul.f32 %v363, %v426
        %v461 = vmul.f32 %v364, %v426
        %v462 = vmul.f32 %v365, %v426
        %v463 = vmul.f32 %v366, %v426
        %v464 = vmul.f32 %v367, %v426
        %v465 = vmul.f32 %v368, %v426
        %v466 = vmul.f32 %v369, %v426
        %v467 = vmul.f32 %v370, %v426
        %v468 = vmul.f32 %v371, %v426
        %v469 = vmul.f32 %v372, %v426
        %v470 = vmul.f32 %v373, %v426
        %v471 = vmul.f32 %v374, %v426
        %v472 = vmul.f32 %v375, %v426
        %v473 = vmul.f32 %v376, %v426
        %v474 = vmul.f32 %v377, %v426
        %v475 = vmul.f32 %v378, %v426
        %v476 = vmul.f32 %v379, %v426
        %v477 = vmul.f32 %v380, %v426
        %v478 = vmul.f32 %v381, %v426
        %v479 = vmul.f32 %v382, %v426
        %v480 = vmul.f32 %v383, %v426
        %v481 = vmul.f32 %v384, %v426
        %v482 = vmul.f32 %v385, %v426
        %v483 = vmul.f32 %v386, %v426
        %v484 = vmul.f32 %v387, %v426
        %v485 = vmul.f32 %v388, %v426
        %v486 = vmul.f32 %v389, %v426
        %v487 = vmul.f32 %v390, %v426
        %v488 = vmul.f32 %v391, %v426
        %v489 = vmul.f32 %v392, %v426
        %v490 = vmul.f32 %v393, %v426
        %v491 = vmul.f32 %v394, %v426
        %v492 = vmul.f32 %v395, %v426
        %v493 = vmul.f32 %v396, %v426
        %v494 = vmul.f32 %v397, %v426
        %v495 = vmul.f32 %v398, %v426
        %v496 = vmul.f32 %v399, %v426
        %v497 = vmul.f32 %v400, %v426
        %v498 = vmul.f32 %v401, %v426
        %v499 = vmul.f32 %v402, %v426
        %v500 = vmul.f32 %v403, %v426
        %v501 = vmul.f32 %v404, %v426
        %v502 = vmul.f32 %v405, %v426
        %v503 = vmul.f32 %v406, %v426
        %v504 = vmul.f32 %v407, %v426
        %v505 = vmul.f32 %v408, %v426
        %v506 = vmul.f32 %v409, %v426
        %v507 = vmul.f32 %v410, %v426
        %v508 = vmul.f32 %v411, %v426
        %v509 = vmul.f32 %v412, %v426
        %v510 = vmul.f32 %v413, %v426
        %v511 = vmul.f32 %v414, %v426
        %v512 = vmul.f32 %v415, %v426
        %v513 = vmul.f32 %v416, %v426
        %v514 = vmul.f32 %v417, %v426
        %v515 = vmul.f32 %v418, %v426
        %v516 = vmul.f32 %v419, %v426
        %v517 = vmul.f32 %v420, %v426
        %v518 = vmul.f32 %v421, %v426
        %v519 = vmul.f32 %v422, %v426
        %v520 = vmul.f32 %v423, %v426
        %v521 = vmul.f32 %v424, %v426
        %v522 = vmul.f32 %v425, %v426
        %523 = vst [vmem:[%s135] sm:$0xff] %v427
        %524 = vst [vmem:[%s135 + $0x8] sm:$0xff] %v428
        %525 = vst [vmem:[%s135 + $0x10] sm:$0xff] %v429
        %526 = vst [vmem:[%s135 + $0x18] sm:$0xff] %v430
        %527 = vst [vmem:[%s135 + $0x20] sm:$0xff] %v431
        %528 = vst [vmem:[%s135 + $0x28] sm:$0xff] %v432
        %529 = vst [vmem:[%s135 + $0x30] sm:$0xff] %v433
        %530 = vst [vmem:[%s135 + $0x38] sm:$0xff] %v434
        %531 = vst [vmem:[%s135 + $0x40] sm:$0xff] %v435
        %532 = vst [vmem:[%s135 + $0x48] sm:$0xff] %v436
        %533 = vst [vmem:[%s135 + $0x50] sm:$0xff] %v437
        %534 = vst [vmem:[%s135 + $0x58] sm:$0xff] %v438
        %535 = vst [vmem:[%s135 + $0x60] sm:$0xff] %v439
        %536 = vst [vmem:[%s135 + $0x68] sm:$0xff] %v440
        %537 = vst [vmem:[%s135 + $0x70] sm:$0xff] %v441
        %538 = vst [vmem:[%s135 + $0x78] sm:$0xff] %v442
        %539 = vst [vmem:[%s135 + $0x80] sm:$0xff] %v443
        %540 = vst [vmem:[%s135 + $0x88] sm:$0xff] %v444
        %541 = vst [vmem:[%s135 + $0x90] sm:$0xff] %v445
        %542 = vst [vmem:[%s135 + $0x98] sm:$0xff] %v446
        %543 = vst [vmem:[%s135 + $0xa0] sm:$0xff] %v447
        %544 = vst [vmem:[%s135 + $0xa8] sm:$0xff] %v448
        %545 = vst [vmem:[%s135 + $0xb0] sm:$0xff] %v449
        %546 = vst [vmem:[%s135 + $0xb8] sm:$0xff] %v450
        %547 = vst [vmem:[%s135 + $0xc0] sm:$0xff] %v451
        %548 = vst [vmem:[%s135 + $0xc8] sm:$0xff] %v452
        %549 = vst [vmem:[%s135 + $0xd0] sm:$0xff] %v453
        %550 = vst [vmem:[%s135 + $0xd8] sm:$0xff] %v454
        %551 = vst [vmem:[%s135 + $0xe0] sm:$0xff] %v455
        %552 = vst [vmem:[%s135 + $0xe8] sm:$0xff] %v456
        %553 = vst [vmem:[%s135 + $0xf0] sm:$0xff] %v457
        %554 = vst [vmem:[%s135 + $0xf8] sm:$0xff] %v458
        %555 = vst [vmem:[%s135 + $0x100] sm:$0xff] %v459
        %556 = vst [vmem:[%s135 + $0x108] sm:$0xff] %v460
        %557 = vst [vmem:[%s135 + $0x110] sm:$0xff] %v461
        %558 = vst [vmem:[%s135 + $0x118] sm:$0xff] %v462
        %559 = vst [vmem:[%s135 + $0x120] sm:$0xff] %v463
        %560 = vst [vmem:[%s135 + $0x128] sm:$0xff] %v464
        %561 = vst [vmem:[%s135 + $0x130] sm:$0xff] %v465
        %562 = vst [vmem:[%s135 + $0x138] sm:$0xff] %v466
        %563 = vst [vmem:[%s135 + $0x140] sm:$0xff] %v467
        %564 = vst [vmem:[%s135 + $0x148] sm:$0xff] %v468
        %565 = vst [vmem:[%s135 + $0x150] sm:$0xff] %v469
        %566 = vst [vmem:[%s135 + $0x158] sm:$0xff] %v470
        %567 = vst [vmem:[%s135 + $0x160] sm:$0xff] %v471
        %568 = vst [vmem:[%s135 + $0x168] sm:$0xff] %v472
        %569 = vst [vmem:[%s135 + $0x170] sm:$0xff] %v473
        %570 = vst [vmem:[%s135 + $0x178] sm:$0xff] %v474
        %571 = vst [vmem:[%s135 + $0x180] sm:$0xff] %v475
        %572 = vst [vmem:[%s135 + $0x188] sm:$0xff] %v476
        %573 = vst [vmem:[%s135 + $0x190] sm:$0xff] %v477
        %574 = vst [vmem:[%s135 + $0x198] sm:$0xff] %v478
        %575 = vst [vmem:[%s135 + $0x1a0] sm:$0xff] %v479
        %576 = vst [vmem:[%s135 + $0x1a8] sm:$0xff] %v480
        %577 = vst [vmem:[%s135 + $0x1b0] sm:$0xff] %v481
        %578 = vst [vmem:[%s135 + $0x1b8] sm:$0xff] %v482
        %579 = vst [vmem:[%s135 + $0x1c0] sm:$0xff] %v483
        %580 = vst [vmem:[%s135 + $0x1c8] sm:$0xff] %v484
        %581 = vst [vmem:[%s135 + $0x1d0] sm:$0xff] %v485
        %582 = vst [vmem:[%s135 + $0x1d8] sm:$0xff] %v486
        %583 = vst [vmem:[%s135 + $0x1e0] sm:$0xff] %v487
        %584 = vst [vmem:[%s135 + $0x1e8] sm:$0xff] %v488
        %585 = vst [vmem:[%s135 + $0x1f0] sm:$0xff] %v489
        %586 = vst [vmem:[%s135 + $0x1f8] sm:$0xff] %v490
        %587 = vst [vmem:[%s135 + $0x200] sm:$0xff] %v491
        %588 = vst [vmem:[%s135 + $0x208] sm:$0xff] %v492
        %589 = vst [vmem:[%s135 + $0x210] sm:$0xff] %v493
        %590 = vst [vmem:[%s135 + $0x218] sm:$0xff] %v494
        %591 = vst [vmem:[%s135 + $0x220] sm:$0xff] %v495
        %592 = vst [vmem:[%s135 + $0x228] sm:$0xff] %v496
        %593 = vst [vmem:[%s135 + $0x230] sm:$0xff] %v497
        %594 = vst [vmem:[%s135 + $0x238] sm:$0xff] %v498
        %595 = vst [vmem:[%s135 + $0x240] sm:$0xff] %v499
        %596 = vst [vmem:[%s135 + $0x248] sm:$0xff] %v500
        %597 = vst [vmem:[%s135 + $0x250] sm:$0xff] %v501
        %598 = vst [vmem:[%s135 + $0x258] sm:$0xff] %v502
        %599 = vst [vmem:[%s135 + $0x260] sm:$0xff] %v503
        %600 = vst [vmem:[%s135 + $0x268] sm:$0xff] %v504
        %601 = vst [vmem:[%s135 + $0x270] sm:$0xff] %v505
        %602 = vst [vmem:[%s135 + $0x278] sm:$0xff] %v506
        %603 = vst [vmem:[%s135 + $0x280] sm:$0xff] %v507
        %604 = vst [vmem:[%s135 + $0x288] sm:$0xff] %v508
        %605 = vst [vmem:[%s135 + $0x290] sm:$0xff] %v509
        %606 = vst [vmem:[%s135 + $0x298] sm:$0xff] %v510
        %607 = vst [vmem:[%s135 + $0x2a0] sm:$0xff] %v511
        %608 = vst [vmem:[%s135 + $0x2a8] sm:$0xff] %v512
        %609 = vst [vmem:[%s135 + $0x2b0] sm:$0xff] %v513
        %610 = vst [vmem:[%s135 + $0x2b8] sm:$0xff] %v514
        %611 = vst [vmem:[%s135 + $0x2c0] sm:$0xff] %v515
        %612 = vst [vmem:[%s135 + $0x2c8] sm:$0xff] %v516
        %613 = vst [vmem:[%s135 + $0x2d0] sm:$0xff] %v517
        %614 = vst [vmem:[%s135 + $0x2d8] sm:$0xff] %v518
        %615 = vst [vmem:[%s135 + $0x2e0] sm:$0xff] %v519
        %616 = vst [vmem:[%s135 + $0x2e8] sm:$0xff] %v520
        %617 = vst [vmem:[%s135 + $0x2f0] sm:$0xff] %v521
        %618 = vst [vmem:[%s135 + $0x2f8] sm:$0xff] %v522
        %s619 = sand.u32 %s52, 1
        %s620 = scalar_lea.sflag [#allocation4], %s619
        %s621 = sand.u32 %s52, 1
        %s622 = smul.addr %s621, 768
        %s623 = scalar_lea.vmem [#allocation5], %s622
        // Predicated region
        $region29: #{tpu_custom_call.1} parent=23 // pred_check
          %p624 = pneg %p62
        $region30: #{tpu_custom_call.1} parent=23 // pred_check_branch
          %626 = sbr.rel (%p624) target = $region32
        $region31: #{tpu_custom_call.1} parent=23 // pred_region
          %s627 = smul.u32 24, %s18
          %s629 = ssub.s32 12288, 12288
          %630 = vsyncadd %s620, %s629
          %s631 = smul.addr %s627, 4
          %s632 = smul.addr %s631, 128
          %s633 = scalar_lea.hbm %s1, %s632
          %s634 = sshll.u32 %s623, 4
          %s635 = int_to_ptr.vmem [resolvable:$true] %s634
          %640 = dma.vmem_to_hbm [thread:$0]  %s635, 12288, %s633, %s620, 512, 512, 32
        $region32: #{tpu_custom_call.1} parent=23 // pred_fallthru
          _
      $region24: #{tpu_custom_call.1} parent=5 // pred_fallthru
        _
      %p641 = scmp.le.s32.totalorder 2, %s13
      // Predicated region
      $region33: #{tpu_custom_call.1} parent=5 // pred_check
        %p642 = pneg %p641
      $region34: #{tpu_custom_call.1} parent=5 // pred_check_branch
        %644 = sbr.rel (%p642) target = $region36
      $region35: #{tpu_custom_call.1} parent=5 // pred_region
        %s645 = ssub.s32 %s13, 2
        // Predicated region
        $region37: #{tpu_custom_call.1} parent=35 // pred_check
          %p646 = pneg %p68
        $region38: #{tpu_custom_call.1} parent=35 // pred_check_branch
          %648 = sbr.rel (%p646) target = $region40
        $region39: #{tpu_custom_call.1} parent=35 // pred_region
          %s649 = sand.u32 %s53, 1
          %s650 = scalar_lea.sflag [#allocation4], %s649
          %s651 = sand.u32 %s53, 1
          %s652 = smul.addr %s651, 768
          %s653 = scalar_lea.vmem [#allocation5], %s652
          %654 = dma.done %s650, 12288
        $region40: #{tpu_custom_call.1} parent=35 // pred_fallthru
          _
      $region36: #{tpu_custom_call.1} parent=5 // pred_fallthru
        _
    $region6: #{tpu_custom_call.1} parent=1 // loop_footer
      %s17 = sadd.s32 1, %s13
    $region7: #{tpu_custom_call.1} parent=1 // loop_footer_branch
      %12 = sbr.rel target = $region3
    $region8: #{tpu_custom_call.1} parent=1 // loop_exit
      _
    %655 = vsyncpa [#allocation3], 1
    %s656 = scalar_lea.sflag [#allocation3], 1
    %657 = vsyncpa %s656, 1
    %658 = vsyncpa [#allocation4], 1
    %s659 = scalar_lea.sflag [#allocation4], 1
    %660 = vsyncpa %s659, 1

</llo_original>
